<compile_context>
chip_gen: v6e
topology: v6e:2x2x1
jax: 0.10.0
libtpu: 0.0.40
codegen_flags: <defaults>
</compile_context>

<pallas_src>
import numpy as np
import jax
import jax.numpy as jnp
from jax.experimental import pallas as pl
from jax.experimental.pallas import tpu as pltpu

BOARD = 4            # board_size
C1 = 16              # conv1 out channels == conv2 in channels
INFL = 16            # inflation (conv2 out channels)
P = BOARD * BOARD    # 16 spatial positions
PC = P * C1          # 256 = (pos, chan) flattened activation width
NEG_SLOPE = 0.2
_HP = jax.lax.Precision.HIGHEST


def _leaky(v):
    return jnp.where(v >= 0, v, NEG_SLOPE * v)


def _spatial_conn():
    """conn[p_in, p_out, k] = 1 if input pos p_in is tap k of output pos p_out
    for a 3x3 kernel with padding=1 on a BOARDxBOARD grid (zero outside)."""
    conn = np.zeros((P, P, 9), np.float32)
    for ho in range(BOARD):
        for wo in range(BOARD):
            for dh in range(3):
                for dw in range(3):
                    hi, wi = ho + dh - 1, wo + dw - 1
                    if 0 <= hi < BOARD and 0 <= wi < BOARD:
                        conn[hi * BOARD + wi, ho * BOARD + wo, dh * 3 + dw] = 1.0
    return conn


def fold_params(params):
    """One-time, host-side (numpy) fold of the PyTorch parameters into the four
    dense matmul operands the kernel consumes.  Hoisted out of the jitted
    forward so it never re-executes on device in the hot path."""
    w1, b1, w2, b2, wl1, bl1, wl2, bl2 = (np.asarray(p, np.float32) for p in params)
    conn = _spatial_conn()                                          # (p_in, p_out, k)

    # conv1 (1->16, 3x3, pad=1) -> (16, 256): W1[p_in, p_out*16 + co]
    w1_k = w1.reshape(C1, 9).T                                      # (k, co)
    W1 = np.einsum('iok,kc->ioc', conn, w1_k).reshape(P, PC)

    # conv2 (16->16, 3x3, pad=1) im2col -> (256, 256): W2[p_in*16+ci, p_out*16+co]
    w2_k = np.transpose(w2.reshape(INFL, C1, 9), (2, 1, 0))         # (k, ci, co)
    W2 = np.einsum('iok,kcd->icod', conn, w2_k).reshape(PC, PC)

    # AvgPool2d(3, pad=1, stride=1, count_include_pad -> /9) fused into lin1,
    # with lin1's input permuted from torch's NCHW flatten (c*16 + h*4 + w)
    # to the kernel's (pos, chan) flatten.
    pool = conn.sum(axis=2) / 9.0                                   # (p_in, p_out)
    wl1_r = np.transpose(wl1.reshape(16, INFL, BOARD, BOARD),
                         (2, 3, 1, 0)).reshape(P, INFL, 16)         # (p_out, c, o)
    WPL = np.einsum('ip,pco->ico', pool, wl1_r).reshape(PC, 16)

    return dict(
        W1=jnp.asarray(W1), b1=jnp.asarray(np.tile(b1, P).reshape(1, PC)),
        W2=jnp.asarray(W2), b2=jnp.asarray(np.tile(b2, P).reshape(1, PC)),
        WPL=jnp.asarray(WPL), bl1=jnp.asarray(bl1.reshape(1, 16)),
        WL2=jnp.asarray(wl2),                    # (4, 16): used in NT matmul
        bl2=jnp.asarray(bl2.reshape(4, 1)),      # column bias for (4, bt) logits
    )


def policy_net_kernel(x_ref, w1_ref, b1_ref, w2_ref, b2_ref,
                      wpl_ref, bl1_ref, wl2_ref, bl2_ref, out_ref):
    # x_ref: (bt, 16) lane-dense flattened board (index = h*4 + w).
    x = x_ref[...]

    # conv1 (+ zero padding folded in) + leaky_relu — one MXU matmul.
    h1 = _leaky(jnp.dot(x, w1_ref[...],
                        preferred_element_type=jnp.float32) + b1_ref[...])   # (bt, 256)

    # conv2 (im2col folded into 256x256) + leaky_relu.
    h2 = _leaky(jnp.dot(h1, w2_ref[...],
                        preferred_element_type=jnp.float32) + b2_ref[...])   # (bt, 256)

    # avg-pool fused into lin1 (256 -> 16) + leaky_relu.
    z1 = _leaky(jnp.dot(h2, wpl_ref[...],
                        preferred_element_type=jnp.float32) + bl1_ref[...])  # (bt, 16)

    # lin2 + softmax computed TRANSPOSED so the batch sits on lanes:
    #   z2t = wl2 (4,16) . z1^T (16,bt) -> (4, bt)   (NT dot, no data transpose)
    z2t = jax.lax.dot_general(wl2_ref[...], z1,
                              dimension_numbers=(((1,), (1,)), ((), ())),
                              preferred_element_type=jnp.float32) + bl2_ref[...]
    z2t = z2t - jnp.max(z2t, axis=0, keepdims=True)
    e = jnp.exp(z2t)
    inv = pl.reciprocal(jnp.sum(e, axis=0, keepdims=True), approx=True)      # EUP slot
    out_ref[...] = e * inv                                                   # (4, bt)


def _choose_bt(B, block_b):
    """Batch tile: single full-batch block for small B (blocks == full dims are
    always legal); otherwise a multiple of 128 (lane dim of the (4, bt) output
    block) with >= 2 grid steps so v7x's two TensorCores both get work."""
    if B <= 256:
        return B
    bt = min(block_b, -(-B // 2))            # keep at least 2 "parallel" steps
    return max(128, (bt // 128) * 128)


def policy_net_forward(x_nchw, folded, *, block_b=4096):
    """x_nchw: (B, 1, 4, 4) float32 (PyTorch NCHW). Returns (B, 4) softmax probs."""
    B = x_nchw.shape[0]
    x_flat = x_nchw.reshape(B, P).astype(jnp.float32)      # (B, 16), index = h*4 + w

    bt = _choose_bt(B, block_b)
    grid = (pl.cdiv(B, bt),)        # no input padding: boundary block is masked
    const = lambda i: (0, 0)        # weights: same block every step -> fetched once

    # VMEM budget (f32): x blocks lane-padded 16->128, out blocks sublane-padded
    # 4->8, double-buffered weights ~0.9 MiB, h1/h2/z1 temporaries ~2.6 KiB/row.
    est_vmem = (2 * bt * 128 * 4 + 2 * 8 * bt * 4
                + 2 * (PC * PC + P * PC + PC * 16 + 4 * PC + 512) * 4
                + bt * (2 * PC + 128) * 4)
    # <= 48 MiB keeps the tile safe on v7x's 64 MiB VMEM; on v5e/v6e (128 MiB)
    # this cap only binds if block_b is pushed well past 4096.
    vmem_limit = int(min(48 * 2**20, max(32 * 2**20, 2 * est_vmem)))

    flops = 2 * B * (P * PC + PC * PC + PC * 16 + 16 * 4)
    bytes_accessed = 4 * (B * (P + 4) + P * PC + PC * PC + PC * 16 + 16 * 4
                          + 2 * PC + 16 + 4)

    out_t = pl.pallas_call(
        policy_net_kernel,
        out_shape=jax.ShapeDtypeStruct((4, B), jnp.float32),   # batch on lanes
        grid=grid,
        in_specs=[
            pl.BlockSpec((bt, P), lambda i: (i, 0)),      # x
            pl.BlockSpec((P, PC), const),                 # conv1 matrix
            pl.BlockSpec((1, PC), const),                 # b1
            pl.BlockSpec((PC, PC), const),                # conv2 matrix
            pl.BlockSpec((1, PC), const),                 # b2
            pl.BlockSpec((PC, 16), const),                # pool+lin1 matrix
            pl.BlockSpec((1, 16), const),                 # bl1
            pl.BlockSpec((4, 16), const),                 # lin2 weight
            pl.BlockSpec((4, 1), const),                  # bl2 column
        ],
        out_specs=pl.BlockSpec((4, bt), lambda i: (0, i)),
        compiler_params=pltpu.CompilerParams(
            dimension_semantics=("parallel",),
            vmem_limit_bytes=vmem_limit),
        cost_estimate=pl.CostEstimate(flops=flops,
                                      transcendentals=5 * B,
                                      bytes_accessed=bytes_accessed),
    )(x_flat, folded['W1'], folded['b1'], folded['W2'], folded['b2'],
      folded['WPL'], folded['bl1'], folded['WL2'], folded['bl2'])

    return jnp.transpose(out_t)    # (B, 4)


def reference_forward(x, params):
    """Pure-JAX reference matching the PyTorch forward exactly."""
    w1, b1, w2, b2, wl1, bl1, wl2, bl2 = params

    def conv(h, w, b):
        y = jax.lax.conv_general_dilated(
            h, w, window_strides=(1, 1), padding=((1, 1), (1, 1)),
            dimension_numbers=('NCHW', 'OIHW', 'NCHW'), precision=_HP)
        return y + b[None, :, None, None]

    h = _leaky(conv(x, w1, b1))
    h = _leaky(conv(h, w2, b2))
    # AvgPool2d(3, padding=1, stride=1), count_include_pad=True -> /9
    h = jax.lax.reduce_window(h, 0.0, jax.lax.add, (1, 1, 3, 3), (1, 1, 1, 1),
                              padding=((0, 0), (0, 0), (1, 1), (1, 1))) / 9.0
    flat = h.reshape(h.shape[0], -1)                      # NCHW flatten
    z1 = _leaky(jnp.matmul(flat, wl1.T, precision=_HP) + bl1)
    z2 = jnp.matmul(z1, wl2.T, precision=_HP) + bl2
    z2 = z2 - jnp.max(z2, axis=1, keepdims=True)
    e = jnp.exp(z2)
    return e / jnp.sum(e, axis=1, keepdims=True)


if __name__ == "__main__":
    key = jax.random.PRNGKey(0)
    ks = jax.random.split(key, 10)

    # deterministic synthetic parameters (shapes from PolicyNet.__init__)
    w1 = jax.random.normal(ks[0], (C1, 1, 3, 3), jnp.float32) * 0.3
    b1 = jax.random.normal(ks[1], (C1,), jnp.float32) * 0.1
    w2 = jax.random.normal(ks[2], (INFL, C1, 3, 3), jnp.float32) * 0.1
    b2 = jax.random.normal(ks[3], (INFL,), jnp.float32) * 0.1
    wl1 = jax.random.normal(ks[4], (16, INFL * BOARD * BOARD), jnp.float32) * 0.05
    bl1 = jax.random.normal(ks[5], (16,), jnp.float32) * 0.1
    wl2 = jax.random.normal(ks[6], (4, 16), jnp.float32) * 0.1
    bl2 = jax.random.normal(ks[7], (4,), jnp.float32) * 0.1
    params = (w1, b1, w2, b2, wl1, bl1, wl2, bl2)

    folded = fold_params(params)                 # one-time host-side weight fold
    fwd = jax.jit(policy_net_forward, static_argnames=("block_b",))

    # small batch (single grid step; blocks equal the full array dims)
    x_small = jax.random.normal(ks[8], (2, 1, BOARD, BOARD), jnp.float32)
    out = jax.block_until_ready(fwd(x_small, folded))
    ref = jax.block_until_ready(reference_forward(x_small, params))
    assert out.shape == (2, 4), out.shape
    if not jnp.allclose(out, ref, atol=1e-3, rtol=1e-3):
        raise AssertionError(f"small-batch mismatch:\nkernel={out}\nref={ref}")

    # larger batch: 3-step "parallel" grid (bt=128) with a masked boundary block
    x_big = jax.random.normal(ks[9], (300, 1, BOARD, BOARD), jnp.float32)
    out_b = jax.block_until_ready(fwd(x_big, folded, block_b=128))
    ref_b = jax.block_until_ready(reference_forward(x_big, params))
    assert out_b.shape == (300, 4), out_b.shape
    if not jnp.allclose(out_b, ref_b, atol=1e-3, rtol=1e-3):
        raise AssertionError("tiled-batch mismatch")

    print("KERNEL_OK")
</pallas_src>

<mosaic_0001>
module attributes {stable_mosaic.version = 11 : i64} {
  func.func @policy_net_kernel(%arg0: i32, %arg1: memref<2x16xf32, #tpu.memory_space<vmem>>, %arg2: memref<16x256xf32, #tpu.memory_space<vmem>>, %arg3: memref<1x256xf32, #tpu.memory_space<vmem>>, %arg4: memref<256x256xf32, #tpu.memory_space<vmem>>, %arg5: memref<1x256xf32, #tpu.memory_space<vmem>>, %arg6: memref<256x16xf32, #tpu.memory_space<vmem>>, %arg7: memref<1x16xf32, #tpu.memory_space<vmem>>, %arg8: memref<4x16xf32, #tpu.memory_space<vmem>>, %arg9: memref<4x1xf32, #tpu.memory_space<vmem>>, %arg10: memref<4x2xf32, #tpu.memory_space<vmem>>) attributes {dimension_semantics = [#tpu.dimension_semantics<parallel>], iteration_bounds = array<i64: 1>, scalar_prefetch = 0 : i64, scratch_operands = 0 : i64, tpu.core_type = #tpu.core_type<tc>, window_params = [{transform_indices = @transform_0, window_bounds = array<i64: 2, 16>}, {pipeline_mode = #tpu.pipeline_mode<synchronous>, transform_indices = @transform_1, window_bounds = array<i64: 16, 256>}, {pipeline_mode = #tpu.pipeline_mode<synchronous>, transform_indices = @transform_2, window_bounds = array<i64: 1, 256>}, {pipeline_mode = #tpu.pipeline_mode<synchronous>, transform_indices = @transform_3, window_bounds = array<i64: 256, 256>}, {pipeline_mode = #tpu.pipeline_mode<synchronous>, transform_indices = @transform_4, window_bounds = array<i64: 1, 256>}, {pipeline_mode = #tpu.pipeline_mode<synchronous>, transform_indices = @transform_5, window_bounds = array<i64: 256, 16>}, {pipeline_mode = #tpu.pipeline_mode<synchronous>, transform_indices = @transform_6, window_bounds = array<i64: 1, 16>}, {pipeline_mode = #tpu.pipeline_mode<synchronous>, transform_indices = @transform_7, window_bounds = array<i64: 4, 16>}, {pipeline_mode = #tpu.pipeline_mode<synchronous>, transform_indices = @transform_8, window_bounds = array<i64: 4, 1>}, {transform_indices = @transform_9, window_bounds = array<i64: 4, 2>}]} {
    %c0 = arith.constant 0 : index
    %c0_0 = arith.constant 0 : index
    %0 = vector.load %arg1[%c0, %c0_0] : memref<2x16xf32, #tpu.memory_space<vmem>>, vector<2x16xf32>
    %c0_1 = arith.constant 0 : index
    %c0_2 = arith.constant 0 : index
    %1 = vector.load %arg2[%c0_1, %c0_2] : memref<16x256xf32, #tpu.memory_space<vmem>>, vector<16x256xf32>
    %cst = arith.constant dense<0.000000e+00> : vector<2x256xf32>
    %2 = tpu.matmul %0, %1, %cst {dimension_numbers = #tpu.dot_dimension_numbers<[1], [0], [0], [1], [0, 0, 1, 1], [], []>} : vector<2x16xf32>, vector<16x256xf32>, vector<2x256xf32> -> vector<2x256xf32>
    %c0_3 = arith.constant 0 : index
    %c0_4 = arith.constant 0 : index
    %3 = vector.load %arg3[%c0_3, %c0_4] : memref<1x256xf32, #tpu.memory_space<vmem>>, vector<1x256xf32>
    %4 = vector.broadcast %3 : vector<1x256xf32> to vector<2x256xf32>
    %5 = arith.addf %2, %4 : vector<2x256xf32>
    %cst_5 = arith.constant 0.000000e+00 : f32
    %6 = vector.broadcast %cst_5 : f32 to vector<2x256xf32>
    %7 = arith.cmpf oge, %5, %6 : vector<2x256xf32>
    %cst_6 = arith.constant 2.000000e-01 : f32
    %8 = vector.broadcast %cst_6 : f32 to vector<2x256xf32>
    %9 = arith.mulf %8, %5 : vector<2x256xf32>
    %10 = arith.select %7, %5, %9 : vector<2x256xi1>, vector<2x256xf32>
    %c0_7 = arith.constant 0 : index
    %c0_8 = arith.constant 0 : index
    %11 = vector.load %arg4[%c0_7, %c0_8] : memref<256x256xf32, #tpu.memory_space<vmem>>, vector<256x256xf32>
    %cst_9 = arith.constant dense<0.000000e+00> : vector<2x256xf32>
    %12 = tpu.matmul %10, %11, %cst_9 {dimension_numbers = #tpu.dot_dimension_numbers<[1], [0], [0], [1], [0, 0, 1, 1], [], []>} : vector<2x256xf32>, vector<256x256xf32>, vector<2x256xf32> -> vector<2x256xf32>
    %c0_10 = arith.constant 0 : index
    %c0_11 = arith.constant 0 : index
    %13 = vector.load %arg5[%c0_10, %c0_11] : memref<1x256xf32, #tpu.memory_space<vmem>>, vector<1x256xf32>
    %14 = vector.broadcast %13 : vector<1x256xf32> to vector<2x256xf32>
    %15 = arith.addf %12, %14 : vector<2x256xf32>
    %cst_12 = arith.constant 0.000000e+00 : f32
    %16 = vector.broadcast %cst_12 : f32 to vector<2x256xf32>
    %17 = arith.cmpf oge, %15, %16 : vector<2x256xf32>
    %cst_13 = arith.constant 2.000000e-01 : f32
    %18 = vector.broadcast %cst_13 : f32 to vector<2x256xf32>
    %19 = arith.mulf %18, %15 : vector<2x256xf32>
    %20 = arith.select %17, %15, %19 : vector<2x256xi1>, vector<2x256xf32>
    %c0_14 = arith.constant 0 : index
    %c0_15 = arith.constant 0 : index
    %21 = vector.load %arg6[%c0_14, %c0_15] : memref<256x16xf32, #tpu.memory_space<vmem>>, vector<256x16xf32>
    %cst_16 = arith.constant dense<0.000000e+00> : vector<2x16xf32>
    %22 = tpu.matmul %20, %21, %cst_16 {dimension_numbers = #tpu.dot_dimension_numbers<[1], [0], [0], [1], [0, 0, 1, 1], [], []>} : vector<2x256xf32>, vector<256x16xf32>, vector<2x16xf32> -> vector<2x16xf32>
    %c0_17 = arith.constant 0 : index
    %c0_18 = arith.constant 0 : index
    %23 = vector.load %arg7[%c0_17, %c0_18] : memref<1x16xf32, #tpu.memory_space<vmem>>, vector<1x16xf32>
    %24 = vector.broadcast %23 : vector<1x16xf32> to vector<2x16xf32>
    %25 = arith.addf %22, %24 : vector<2x16xf32>
    %cst_19 = arith.constant 0.000000e+00 : f32
    %26 = vector.broadcast %cst_19 : f32 to vector<2x16xf32>
    %27 = arith.cmpf oge, %25, %26 : vector<2x16xf32>
    %cst_20 = arith.constant 2.000000e-01 : f32
    %28 = vector.broadcast %cst_20 : f32 to vector<2x16xf32>
    %29 = arith.mulf %28, %25 : vector<2x16xf32>
    %30 = arith.select %27, %25, %29 : vector<2x16xi1>, vector<2x16xf32>
    %c0_21 = arith.constant 0 : index
    %c0_22 = arith.constant 0 : index
    %31 = vector.load %arg8[%c0_21, %c0_22] : memref<4x16xf32, #tpu.memory_space<vmem>>, vector<4x16xf32>
    %cst_23 = arith.constant dense<0.000000e+00> : vector<4x2xf32>
    %32 = tpu.matmul %31, %30, %cst_23 {dimension_numbers = #tpu.dot_dimension_numbers<[1], [1], [0], [0], [0, 0, 1, 0], [], []>} : vector<4x16xf32>, vector<2x16xf32>, vector<4x2xf32> -> vector<4x2xf32>
    %c0_24 = arith.constant 0 : index
    %c0_25 = arith.constant 0 : index
    %33 = vector.load %arg9[%c0_24, %c0_25] : memref<4x1xf32, #tpu.memory_space<vmem>>, vector<4x1xf32>
    %34 = vector.broadcast %33 : vector<4x1xf32> to vector<4x2xf32>
    %35 = arith.addf %32, %34 : vector<4x2xf32>
    %cst_26 = arith.constant dense<0xFF800000> : vector<2xf32>
    %36 = vector.multi_reduction <maximumf>, %35, %cst_26 [0] : vector<4x2xf32> to vector<2xf32>
    %37 = vector.shape_cast %36 : vector<2xf32> to vector<1x2xf32>
    %38 = vector.broadcast %37 : vector<1x2xf32> to vector<4x2xf32>
    %39 = arith.subf %35, %38 : vector<4x2xf32>
    %40 = math.exp %39 : vector<4x2xf32>
    %cst_27 = arith.constant dense<0.000000e+00> : vector<2xf32>
    %41 = vector.multi_reduction <add>, %40, %cst_27 [0] : vector<4x2xf32> to vector<2xf32>
    %42 = vector.shape_cast %41 : vector<2xf32> to vector<1x2xf32>
    %43 = tpu.reciprocal %42 {approx = true} : vector<1x2xf32> -> vector<1x2xf32>
    %44 = vector.broadcast %43 : vector<1x2xf32> to vector<4x2xf32>
    %45 = arith.mulf %40, %44 : vector<4x2xf32>
    %c0_28 = arith.constant 0 : index
    %c0_29 = arith.constant 0 : index
    %46 = vector.load %arg10[%c0_28, %c0_29] : memref<4x2xf32, #tpu.memory_space<vmem>>, vector<4x2xf32>
    tpu.vector_store %arg10[%c0_28, %c0_29], %45 {strides = array<i32>} : memref<4x2xf32, #tpu.memory_space<vmem>>, vector<4x2xf32>,
    return
  }
  func.func @transform_0(%arg0: i32) -> (i32, i32) {
    %c0_i32 = arith.constant 0 : i32
    %c0_i32_0 = arith.constant 0 : i32
    return %arg0, %c0_i32 : i32, i32
  }
  func.func @transform_1(%arg0: i32) -> (i32, i32) {
    %c0_i32 = arith.constant 0 : i32
    %c0_i32_0 = arith.constant 0 : i32
    %c0_i32_1 = arith.constant 0 : i32
    return %c0_i32, %c0_i32_0 : i32, i32
  }
  func.func @transform_2(%arg0: i32) -> (i32, i32) {
    %c0_i32 = arith.constant 0 : i32
    %c0_i32_0 = arith.constant 0 : i32
    %c0_i32_1 = arith.constant 0 : i32
    return %c0_i32, %c0_i32_0 : i32, i32
  }
  func.func @transform_3(%arg0: i32) -> (i32, i32) {
    %c0_i32 = arith.constant 0 : i32
    %c0_i32_0 = arith.constant 0 : i32
    %c0_i32_1 = arith.constant 0 : i32
    return %c0_i32, %c0_i32_0 : i32, i32
  }
  func.func @transform_4(%arg0: i32) -> (i32, i32) {
    %c0_i32 = arith.constant 0 : i32
    %c0_i32_0 = arith.constant 0 : i32
    %c0_i32_1 = arith.constant 0 : i32
    return %c0_i32, %c0_i32_0 : i32, i32
  }
  func.func @transform_5(%arg0: i32) -> (i32, i32) {
    %c0_i32 = arith.constant 0 : i32
    %c0_i32_0 = arith.constant 0 : i32
    %c0_i32_1 = arith.constant 0 : i32
    return %c0_i32, %c0_i32_0 : i32, i32
  }
  func.func @transform_6(%arg0: i32) -> (i32, i32) {
    %c0_i32 = arith.constant 0 : i32
    %c0_i32_0 = arith.constant 0 : i32
    %c0_i32_1 = arith.constant 0 : i32
    return %c0_i32, %c0_i32_0 : i32, i32
  }
  func.func @transform_7(%arg0: i32) -> (i32, i32) {
    %c0_i32 = arith.constant 0 : i32
    %c0_i32_0 = arith.constant 0 : i32
    %c0_i32_1 = arith.constant 0 : i32
    return %c0_i32, %c0_i32_0 : i32, i32
  }
  func.func @transform_8(%arg0: i32) -> (i32, i32) {
    %c0_i32 = arith.constant 0 : i32
    %c0_i32_0 = arith.constant 0 : i32
    %c0_i32_1 = arith.constant 0 : i32
    return %c0_i32, %c0_i32_0 : i32, i32
  }
  func.func @transform_9(%arg0: i32) -> (i32, i32) {
    %c0_i32 = arith.constant 0 : i32
    %c0_i32_0 = arith.constant 0 : i32
    return %c0_i32, %arg0 : i32, i32
  }
}

</mosaic_0001>

<llo_original>
// kernel: policy_net_forward.1
$region0: #{policy_net_forward.1}
  #allocation0 [shape = 'u32[]', space=smem, size = 0x4, offset = 0x4, fixed_abs, tag = 'smem constant byte address 0x4 - core index']
  #allocation1 [shape = 'u32[144,128]{1,0:T(1,128)}', space=vmem, size = 0x12000, scoped, tag = 'internal scratch']
  %s0 = inlined_call_operand.vmem [shape: f32[2,16], index: 0, kind: input, shape index: {}]
  %s1 = inlined_call_operand.vmem [shape: f32[16,256], index: 1, kind: input, shape index: {}]
  %s2 = inlined_call_operand.vmem [shape: f32[1,256], index: 2, kind: input, shape index: {}]
  %s3 = inlined_call_operand.hbm [shape: f32[256,256], index: 3, kind: input, shape index: {}]
  %s4 = inlined_call_operand.vmem [shape: f32[1,256], index: 4, kind: input, shape index: {}]
  %s5 = inlined_call_operand.vmem [shape: f32[256,16], index: 5, kind: input, shape index: {}]
  %s6 = inlined_call_operand.vmem [shape: f32[1,16], index: 6, kind: input, shape index: {}]
  %s7 = inlined_call_operand.vmem [shape: f32[4,16], index: 7, kind: input, shape index: {}]
  %s8 = inlined_call_operand.vmem [shape: f32[4,1], index: 8, kind: input, shape index: {}]
  %s9 = inlined_call_operand.vmem [shape: f32[4,2], index: 9, kind: output, shape index: {}]
  %s10 = sld [smem:[#allocation0]]
  $region50: #{policy_net_forward.1} parent=0
    _
  %s12 = ssub.s32 1, %s10
  %s13 = scalar_select 0, %s12, %s10
  $region1: #{policy_net_forward.1} parent=0
    #allocation2 [shape = 'u8[262144]{0}', space=vmem, size = 0x40000, scoped, tag = 'input window, operand 3, single buffered']
    #allocation3 [shape = 's32[1]{0}', space=sflag, size = 0x4, scoped, tag = 'scoped memory for policy_net_forward.1']
    %14 = vsyncpa [#allocation3], 0
    // Predicated region
    $region2: #{policy_net_forward.1} parent=1 // pred_check
      _
    $region3: #{policy_net_forward.1} parent=1 // pred_check_branch
      %16 = sbr.rel (0) target = $region5
    $region4: #{policy_net_forward.1} parent=1 // pred_region
      _
    $region5: #{policy_net_forward.1} parent=1 // pred_fallthru
      _
    // Predicated region
    $region6: #{policy_net_forward.1} parent=1 // pred_check
      _
    $region7: #{policy_net_forward.1} parent=1 // pred_check_branch
      %18 = sbr.rel (0) target = $region9
    $region8: #{policy_net_forward.1} parent=1 // pred_region
      _
    $region9: #{policy_net_forward.1} parent=1 // pred_fallthru
      _
    // Predicated region
    $region10: #{policy_net_forward.1} parent=1 // pred_check
      _
    $region11: #{policy_net_forward.1} parent=1 // pred_check_branch
      %20 = sbr.rel (0) target = $region13
    $region12: #{policy_net_forward.1} parent=1 // pred_region
      _
    $region13: #{policy_net_forward.1} parent=1 // pred_fallthru
      _
    // Predicated region
    $region14: #{policy_net_forward.1} parent=1 // pred_check
      _
    $region15: #{policy_net_forward.1} parent=1 // pred_check_branch
      %22 = sbr.rel (0) target = $region17
    $region16: #{policy_net_forward.1} parent=1 // pred_region
      %s24 = ssub.s32 8192, 8192
      %25 = vsyncadd [#allocation3], %s24
      %s26 = sshll.u32 [#allocation2], 4
      %s27 = int_to_ptr.vmem [resolvable:$true] %s26
      %32 = dma.hbm_to_vmem [thread:$0]  %s3, 8192, %s27, [#allocation3], 256, 256, 16
    $region17: #{policy_net_forward.1} parent=1 // pred_fallthru
      _
    // Predicated region
    $region18: #{policy_net_forward.1} parent=1 // pred_check
      _
    $region19: #{policy_net_forward.1} parent=1 // pred_check_branch
      %34 = sbr.rel (0) target = $region21
    $region20: #{policy_net_forward.1} parent=1 // pred_region
      _
    $region21: #{policy_net_forward.1} parent=1 // pred_fallthru
      _
    // Predicated region
    $region22: #{policy_net_forward.1} parent=1 // pred_check
      _
    $region23: #{policy_net_forward.1} parent=1 // pred_check_branch
      %36 = sbr.rel (0) target = $region25
    $region24: #{policy_net_forward.1} parent=1 // pred_region
      _
    $region25: #{policy_net_forward.1} parent=1 // pred_fallthru
      _
    // Predicated region
    $region26: #{policy_net_forward.1} parent=1 // pred_check
      _
    $region27: #{policy_net_forward.1} parent=1 // pred_check_branch
      %38 = sbr.rel (0) target = $region29
    $region28: #{policy_net_forward.1} parent=1 // pred_region
      _
    $region29: #{policy_net_forward.1} parent=1 // pred_fallthru
      _
    // Predicated region
    $region30: #{policy_net_forward.1} parent=1 // pred_check
      _
    $region31: #{policy_net_forward.1} parent=1 // pred_check_branch
      %40 = sbr.rel (0) target = $region33
    $region32: #{policy_net_forward.1} parent=1 // pred_region
      _
    $region33: #{policy_net_forward.1} parent=1 // pred_fallthru
      _
    // Predicated region
    $region34: #{policy_net_forward.1} parent=1 // pred_check
      _
    $region35: #{policy_net_forward.1} parent=1 // pred_check_branch
      %42 = sbr.rel (0) target = $region37
    $region36: #{policy_net_forward.1} parent=1 // pred_region
      _
    $region37: #{policy_net_forward.1} parent=1 // pred_fallthru
      _
    // Predicated region
    $region38: #{policy_net_forward.1} parent=1 // pred_check
      _
    $region39: #{policy_net_forward.1} parent=1 // pred_check_branch
      %44 = sbr.rel (0) target = $region41
    $region40: #{policy_net_forward.1} parent=1 // pred_region
      %45 = dma.done [#allocation3], 8192
    $region41: #{policy_net_forward.1} parent=1 // pred_fallthru
      _
    %v46 = vld [vmem:[%s0] sm:$0x3]
    %v47 = vld [vmem:[%s1] sm:$0xff]
    %v48 = vld [vmem:[%s1 + $0x8] sm:$0xff]
    %v49 = vld [vmem:[%s1 + $0x10] sm:$0xff]
    %v50 = vld [vmem:[%s1 + $0x18] sm:$0xff]
    %v51 = vld [vmem:[%s2] sm:$0x3]
    %v53 = vlaneseq
    %v54 = vshrl.u32 %v53, 7
    %v55 = vsub.s32 0, %v54
    %v56 = vrot.slane %v51, %v55
    %v57 = vlaneseq
    %v58 = vshrl.u32 %v57, 7
    %v59 = vsub.s32 1, %v58
    %v60 = vrot.slane %v51, %v59
    %vm63 = vcmask 130048
    %v65 = vsel %vm63, %v46, 0
    %67 = vmatprep.subr.mxu0 0.0
    %68 = vmatpush1.msra.mxu0 0.0
    %69 = vmatprep.subr.mxu0 0.0
    %70 = vmatpush1.msra.mxu0 0.0
    %71 = vmatprep.subr.mxu0 0.0
    %72 = vmatpush1.msra.mxu0 0.0
    %73 = vmatprep.subr.mxu0 0.0
    %74 = vmatpush1.msra.mxu0 0.0
    %75 = vmatprep.subr.mxu0 0.0
    %76 = vmatpush1.msra.mxu0 0.0
    %77 = vmatprep.subr.mxu0 0.0
    %78 = vmatpush1.msra.mxu0 0.0
    %79 = vmatprep.subr.mxu0 0.0
    %80 = vmatpush1.msra.mxu0 0.0
    %81 = vmatprep.subr.mxu0 0.0
    %82 = vmatpush1.msra.mxu0 0.0
    %83 = vmatprep.subr.mxu0 0.0
    %84 = vmatpush1.msra.mxu0 0.0
    %85 = vmatprep.subr.mxu0 0.0
    %86 = vmatpush1.msra.mxu0 0.0
    %87 = vmatprep.subr.mxu0 0.0
    %88 = vmatpush1.msra.mxu0 0.0
    %89 = vmatprep.subr.mxu0 0.0
    %90 = vmatpush1.msra.mxu0 0.0
    %91 = vmatprep.subr.mxu0 0.0
    %92 = vmatpush1.msra.mxu0 0.0
    %93 = vmatprep.subr.mxu0 0.0
    %94 = vmatpush1.msra.mxu0 0.0
    %95 = vmatprep.subr.mxu0 %v50
    %96 = vmatpush1.msra.mxu0 %v49
    %97 = vmatprep.subr.mxu0 %v48
    %98 = vmatpush1.msra.mxu0 %v47
    %99 = vmatprep.subr.mxu0 0.0
    %100 = vmatpush2.msra.mxu0 0.0
    %101 = vmatprep.subr.mxu0 0.0
    %102 = vmatpush2.msra.mxu0 0.0
    %103 = vmatprep.subr.mxu0 0.0
    %104 = vmatpush2.msra.mxu0 0.0
    %105 = vmatprep.subr.mxu0 0.0
    %106 = vmatpush2.msra.mxu0 0.0
    %107 = vmatprep.subr.mxu0 0.0
    %108 = vmatpush2.msra.mxu0 0.0
    %109 = vmatprep.subr.mxu0 0.0
    %110 = vmatpush2.msra.mxu0 0.0
    %111 = vmatprep.subr.mxu0 0.0
    %112 = vmatpush2.msra.mxu0 0.0
    %113 = vmatprep.subr.mxu0 0.0
    %114 = vmatpush2.msra.mxu0 0.0
    %115 = vmatprep.subr.mxu0 0.0
    %116 = vmatpush2.msra.mxu0 0.0
    %117 = vmatprep.subr.mxu0 0.0
    %118 = vmatpush2.msra.mxu0 0.0
    %119 = vmatprep.subr.mxu0 0.0
    %120 = vmatpush2.msra.mxu0 0.0
    %121 = vmatprep.subr.mxu0 0.0
    %122 = vmatpush2.msra.mxu0 0.0
    %123 = vmatprep.subr.mxu0 0.0
    %124 = vmatpush2.msra.mxu0 0.0
    %125 = vmatprep.subr.mxu0 0.0
    %126 = vmatpush2.msra.mxu0 0.0
    %127 = vmatprep.subr.mxu0 0.0
    %128 = vmatpush2.msra.mxu0 0.0
    %129 = vmatprep.subr.mxu0 0.0
    %130 = vmatpush2.msra.mxu0 0.0
    %131 = vmatprep.mubr.f32.mxu0 0.0
    %132 = vmatmul.mubr.f32.gmra.mxu0 %v65
    %v133 = vpop.f32.mrf.mxu0
    %v134 = vadd.f32 %v56, %v133
    %v135 = vpop.f32.mrf.mxu0
    %v136 = vadd.f32 %v60, %v135
    %137 = vdwg.mxu0
    %vm138 = vcmp.ge.f32.partialorder %v134, 0.0
    %vm139 = vcmp.ge.f32.partialorder %v136, 0.0
    %v140 = vmul.f32 %v134, 0.2
    %v141 = vmul.f32 %v136, 0.2
    %v142 = vsel %vm138, %v134, %v140
    %v143 = vsel %vm139, %v136, %v141
    %v144 = vld [vmem:[#allocation2] sm:$0xff]
    %v145 = vld [vmem:[#allocation2 + $0x8] sm:$0xff]
    %v146 = vld [vmem:[#allocation2 + $0x10] sm:$0xff]
    %v147 = vld [vmem:[#allocation2 + $0x18] sm:$0xff]
    %v148 = vld [vmem:[#allocation2 + $0x20] sm:$0xff]
    %v149 = vld [vmem:[#allocation2 + $0x28] sm:$0xff]
    %v150 = vld [vmem:[#allocation2 + $0x30] sm:$0xff]
    %v151 = vld [vmem:[#allocation2 + $0x38] sm:$0xff]
    %v152 = vld [vmem:[#allocation2 + $0x40] sm:$0xff]
    %v153 = vld [vmem:[#allocation2 + $0x48] sm:$0xff]
    %v154 = vld [vmem:[#allocation2 + $0x50] sm:$0xff]
    %v155 = vld [vmem:[#allocation2 + $0x58] sm:$0xff]
    %v156 = vld [vmem:[#allocation2 + $0x60] sm:$0xff]
    %v157 = vld [vmem:[#allocation2 + $0x68] sm:$0xff]
    %v158 = vld [vmem:[#allocation2 + $0x70] sm:$0xff]
    %v159 = vld [vmem:[#allocation2 + $0x78] sm:$0xff]
    %v160 = vld [vmem:[#allocation2 + $0x80] sm:$0xff]
    %v161 = vld [vmem:[#allocation2 + $0x88] sm:$0xff]
    %v162 = vld [vmem:[#allocation2 + $0x90] sm:$0xff]
    %v163 = vld [vmem:[#allocation2 + $0x98] sm:$0xff]
    %v164 = vld [vmem:[#allocation2 + $0xa0] sm:$0xff]
    %v165 = vld [vmem:[#allocation2 + $0xa8] sm:$0xff]
    %v166 = vld [vmem:[#allocation2 + $0xb0] sm:$0xff]
    %v167 = vld [vmem:[#allocation2 + $0xb8] sm:$0xff]
    %v168 = vld [vmem:[#allocation2 + $0xc0] sm:$0xff]
    %v169 = vld [vmem:[#allocation2 + $0xc8] sm:$0xff]
    %v170 = vld [vmem:[#allocation2 + $0xd0] sm:$0xff]
    %v171 = vld [vmem:[#allocation2 + $0xd8] sm:$0xff]
    %v172 = vld [vmem:[#allocation2 + $0xe0] sm:$0xff]
    %v173 = vld [vmem:[#allocation2 + $0xe8] sm:$0xff]
    %v174 = vld [vmem:[#allocation2 + $0xf0] sm:$0xff]
    %v175 = vld [vmem:[#allocation2 + $0xf8] sm:$0xff]
    %v176 = vld [vmem:[#allocation2 + $0x100] sm:$0xff]
    %v177 = vld [vmem:[#allocation2 + $0x108] sm:$0xff]
    %v178 = vld [vmem:[#allocation2 + $0x110] sm:$0xff]
    %v179 = vld [vmem:[#allocation2 + $0x118] sm:$0xff]
    %v180 = vld [vmem:[#allocation2 + $0x120] sm:$0xff]
    %v181 = vld [vmem:[#allocation2 + $0x128] sm:$0xff]
    %v182 = vld [vmem:[#allocation2 + $0x130] sm:$0xff]
    %v183 = vld [vmem:[#allocation2 + $0x138] sm:$0xff]
    %v184 = vld [vmem:[#allocation2 + $0x140] sm:$0xff]
    %v185 = vld [vmem:[#allocation2 + $0x148] sm:$0xff]
    %v186 = vld [vmem:[#allocation2 + $0x150] sm:$0xff]
    %v187 = vld [vmem:[#allocation2 + $0x158] sm:$0xff]
    %v188 = vld [vmem:[#allocation2 + $0x160] sm:$0xff]
    %v189 = vld [vmem:[#allocation2 + $0x168] sm:$0xff]
    %v190 = vld [vmem:[#allocation2 + $0x170] sm:$0xff]
    %v191 = vld [vmem:[#allocation2 + $0x178] sm:$0xff]
    %v192 = vld [vmem:[#allocation2 + $0x180] sm:$0xff]
    %v193 = vld [vmem:[#allocation2 + $0x188] sm:$0xff]
    %v194 = vld [vmem:[#allocation2 + $0x190] sm:$0xff]
    %v195 = vld [vmem:[#allocation2 + $0x198] sm:$0xff]
    %v196 = vld [vmem:[#allocation2 + $0x1a0] sm:$0xff]
    %v197 = vld [vmem:[#allocation2 + $0x1a8] sm:$0xff]
    %v198 = vld [vmem:[#allocation2 + $0x1b0] sm:$0xff]
    %v199 = vld [vmem:[#allocation2 + $0x1b8] sm:$0xff]
    %v200 = vld [vmem:[#allocation2 + $0x1c0] sm:$0xff]
    %v201 = vld [vmem:[#allocation2 + $0x1c8] sm:$0xff]
    %v202 = vld [vmem:[#allocation2 + $0x1d0] sm:$0xff]
    %v203 = vld [vmem:[#allocation2 + $0x1d8] sm:$0xff]
    %v204 = vld [vmem:[#allocation2 + $0x1e0] sm:$0xff]
    %v205 = vld [vmem:[#allocation2 + $0x1e8] sm:$0xff]
    %v206 = vld [vmem:[#allocation2 + $0x1f0] sm:$0xff]
    %v207 = vld [vmem:[#allocation2 + $0x1f8] sm:$0xff]
    %v208 = vld [vmem:[%s4] sm:$0x3]
    %v210 = vlaneseq
    %v211 = vshrl.u32 %v210, 7
    %v212 = vsub.s32 0, %v211
    %v213 = vrot.slane %v208, %v212
    %v214 = vlaneseq
    %v215 = vshrl.u32 %v214, 7
    %v216 = vsub.s32 1, %v215
    %v217 = vrot.slane %v208, %v216
    %220 = vmatprep.subr.mxu0 %v175
    %221 = vmatpush1.msra.mxu0 %v174
    %222 = vmatprep.subr.mxu0 %v173
    %223 = vmatpush1.msra.mxu0 %v172
    %224 = vmatprep.subr.mxu0 %v171
    %225 = vmatpush1.msra.mxu0 %v170
    %226 = vmatprep.subr.mxu0 %v169
    %227 = vmatpush1.msra.mxu0 %v168
    %228 = vmatprep.subr.mxu0 %v167
    %229 = vmatpush1.msra.mxu0 %v166
    %230 = vmatprep.subr.mxu0 %v165
    %231 = vmatpush1.msra.mxu0 %v164
    %232 = vmatprep.subr.mxu0 %v163
    %233 = vmatpush1.msra.mxu0 %v162
    %234 = vmatprep.subr.mxu0 %v161
    %235 = vmatpush1.msra.mxu0 %v160
    %236 = vmatprep.subr.mxu0 %v159
    %237 = vmatpush1.msra.mxu0 %v158
    %238 = vmatprep.subr.mxu0 %v157
    %239 = vmatpush1.msra.mxu0 %v156
    %240 = vmatprep.subr.mxu0 %v155
    %241 = vmatpush1.msra.mxu0 %v154
    %242 = vmatprep.subr.mxu0 %v153
    %243 = vmatpush1.msra.mxu0 %v152
    %244 = vmatprep.subr.mxu0 %v151
    %245 = vmatpush1.msra.mxu0 %v150
    %246 = vmatprep.subr.mxu0 %v149
    %247 = vmatpush1.msra.mxu0 %v148
    %248 = vmatprep.subr.mxu0 %v147
    %249 = vmatpush1.msra.mxu0 %v146
    %250 = vmatprep.subr.mxu0 %v145
    %251 = vmatpush1.msra.mxu0 %v144
    %252 = vmatprep.subr.mxu0 %v207
    %253 = vmatpush2.msra.mxu0 %v206
    %254 = vmatprep.subr.mxu0 %v205
    %255 = vmatpush2.msra.mxu0 %v204
    %256 = vmatprep.subr.mxu0 %v203
    %257 = vmatpush2.msra.mxu0 %v202
    %258 = vmatprep.subr.mxu0 %v201
    %259 = vmatpush2.msra.mxu0 %v200
    %260 = vmatprep.subr.mxu0 %v199
    %261 = vmatpush2.msra.mxu0 %v198
    %262 = vmatprep.subr.mxu0 %v197
    %263 = vmatpush2.msra.mxu0 %v196
    %264 = vmatprep.subr.mxu0 %v195
    %265 = vmatpush2.msra.mxu0 %v194
    %266 = vmatprep.subr.mxu0 %v193
    %267 = vmatpush2.msra.mxu0 %v192
    %268 = vmatprep.subr.mxu0 %v191
    %269 = vmatpush2.msra.mxu0 %v190
    %270 = vmatprep.subr.mxu0 %v189
    %271 = vmatpush2.msra.mxu0 %v188
    %272 = vmatprep.subr.mxu0 %v187
    %273 = vmatpush2.msra.mxu0 %v186
    %274 = vmatprep.subr.mxu0 %v185
    %275 = vmatpush2.msra.mxu0 %v184
    %276 = vmatprep.subr.mxu0 %v183
    %277 = vmatpush2.msra.mxu0 %v182
    %278 = vmatprep.subr.mxu0 %v181
    %279 = vmatpush2.msra.mxu0 %v180
    %280 = vmatprep.subr.mxu0 %v179
    %281 = vmatpush2.msra.mxu0 %v178
    %282 = vmatprep.subr.mxu0 %v177
    %283 = vmatpush2.msra.mxu0 %v176
    %284 = vmatprep.mubr.f32.mxu0 %v143
    %285 = vmatmul.mubr.f32.gmra.mxu0 %v142
    %v286 = vpop.f32.mrf.mxu0
    %v287 = vadd.f32 %v213, %v286
    %v288 = vpop.f32.mrf.mxu0
    %v289 = vadd.f32 %v217, %v288
    %290 = vdwg.mxu0
    %vm291 = vcmp.ge.f32.partialorder %v287, 0.0
    %vm292 = vcmp.ge.f32.partialorder %v289, 0.0
    %v293 = vmul.f32 %v287, 0.2
    %v294 = vmul.f32 %v289, 0.2
    %v295 = vsel %vm291, %v287, %v293
    %v296 = vsel %vm292, %v289, %v294
    %v297 = vld [vmem:[%s5] sm:$0xff]
    %v298 = vld [vmem:[%s5 + $0x8] sm:$0xff]
    %v299 = vld [vmem:[%s5 + $0x10] sm:$0xff]
    %v300 = vld [vmem:[%s5 + $0x18] sm:$0xff]
    %v301 = vld [vmem:[%s5 + $0x20] sm:$0xff]
    %v302 = vld [vmem:[%s5 + $0x28] sm:$0xff]
    %v303 = vld [vmem:[%s5 + $0x30] sm:$0xff]
    %v304 = vld [vmem:[%s5 + $0x38] sm:$0xff]
    %v305 = vld [vmem:[%s5 + $0x40] sm:$0xff]
    %v306 = vld [vmem:[%s5 + $0x48] sm:$0xff]
    %v307 = vld [vmem:[%s5 + $0x50] sm:$0xff]
    %v308 = vld [vmem:[%s5 + $0x58] sm:$0xff]
    %v309 = vld [vmem:[%s5 + $0x60] sm:$0xff]
    %v310 = vld [vmem:[%s5 + $0x68] sm:$0xff]
    %v311 = vld [vmem:[%s5 + $0x70] sm:$0xff]
    %v312 = vld [vmem:[%s5 + $0x78] sm:$0xff]
    %v313 = vld [vmem:[%s5 + $0x80] sm:$0xff]
    %v314 = vld [vmem:[%s5 + $0x88] sm:$0xff]
    %v315 = vld [vmem:[%s5 + $0x90] sm:$0xff]
    %v316 = vld [vmem:[%s5 + $0x98] sm:$0xff]
    %v317 = vld [vmem:[%s5 + $0xa0] sm:$0xff]
    %v318 = vld [vmem:[%s5 + $0xa8] sm:$0xff]
    %v319 = vld [vmem:[%s5 + $0xb0] sm:$0xff]
    %v320 = vld [vmem:[%s5 + $0xb8] sm:$0xff]
    %v321 = vld [vmem:[%s5 + $0xc0] sm:$0xff]
    %v322 = vld [vmem:[%s5 + $0xc8] sm:$0xff]
    %v323 = vld [vmem:[%s5 + $0xd0] sm:$0xff]
    %v324 = vld [vmem:[%s5 + $0xd8] sm:$0xff]
    %v325 = vld [vmem:[%s5 + $0xe0] sm:$0xff]
    %v326 = vld [vmem:[%s5 + $0xe8] sm:$0xff]
    %v327 = vld [vmem:[%s5 + $0xf0] sm:$0xff]
    %v328 = vld [vmem:[%s5 + $0xf8] sm:$0xff]
    %v329 = vld [vmem:[%s6] sm:$0x1]
    %v331 = vlaneseq
    %v332 = vshrl.u32 %v331, 7
    %v333 = vsub.s32 0, %v332
    %v334 = vrot.slane %v329, %v333
    %336 = vmatprep.subr.mxu0 0.0
    %337 = vmatpush1.msra.mxu0 %v312
    %338 = vmatprep.subr.mxu0 0.0
    %339 = vmatpush1.msra.mxu0 %v311
    %340 = vmatprep.subr.mxu0 0.0
    %341 = vmatpush1.msra.mxu0 %v310
    %342 = vmatprep.subr.mxu0 0.0
    %343 = vmatpush1.msra.mxu0 %v309
    %344 = vmatprep.subr.mxu0 0.0
    %345 = vmatpush1.msra.mxu0 %v308
    %346 = vmatprep.subr.mxu0 0.0
    %347 = vmatpush1.msra.mxu0 %v307
    %348 = vmatprep.subr.mxu0 0.0
    %349 = vmatpush1.msra.mxu0 %v306
    %350 = vmatprep.subr.mxu0 0.0
    %351 = vmatpush1.msra.mxu0 %v305
    %352 = vmatprep.subr.mxu0 0.0
    %353 = vmatpush1.msra.mxu0 %v304
    %354 = vmatprep.subr.mxu0 0.0
    %355 = vmatpush1.msra.mxu0 %v303
    %356 = vmatprep.subr.mxu0 0.0
    %357 = vmatpush1.msra.mxu0 %v302
    %358 = vmatprep.subr.mxu0 0.0
    %359 = vmatpush1.msra.mxu0 %v301
    %360 = vmatprep.subr.mxu0 0.0
    %361 = vmatpush1.msra.mxu0 %v300
    %362 = vmatprep.subr.mxu0 0.0
    %363 = vmatpush1.msra.mxu0 %v299
    %364 = vmatprep.subr.mxu0 0.0
    %365 = vmatpush1.msra.mxu0 %v298
    %366 = vmatprep.subr.mxu0 0.0
    %367 = vmatpush1.msra.mxu0 %v297
    %368 = vmatprep.subr.mxu0 0.0
    %369 = vmatpush2.msra.mxu0 %v328
    %370 = vmatprep.subr.mxu0 0.0
    %371 = vmatpush2.msra.mxu0 %v327
    %372 = vmatprep.subr.mxu0 0.0
    %373 = vmatpush2.msra.mxu0 %v326
    %374 = vmatprep.subr.mxu0 0.0
    %375 = vmatpush2.msra.mxu0 %v325
    %376 = vmatprep.subr.mxu0 0.0
    %377 = vmatpush2.msra.mxu0 %v324
    %378 = vmatprep.subr.mxu0 0.0
    %379 = vmatpush2.msra.mxu0 %v323
    %380 = vmatprep.subr.mxu0 0.0
    %381 = vmatpush2.msra.mxu0 %v322
    %382 = vmatprep.subr.mxu0 0.0
    %383 = vmatpush2.msra.mxu0 %v321
    %384 = vmatprep.subr.mxu0 0.0
    %385 = vmatpush2.msra.mxu0 %v320
    %386 = vmatprep.subr.mxu0 0.0
    %387 = vmatpush2.msra.mxu0 %v319
    %388 = vmatprep.subr.mxu0 0.0
    %389 = vmatpush2.msra.mxu0 %v318
    %390 = vmatprep.subr.mxu0 0.0
    %391 = vmatpush2.msra.mxu0 %v317
    %392 = vmatprep.subr.mxu0 0.0
    %393 = vmatpush2.msra.mxu0 %v316
    %394 = vmatprep.subr.mxu0 0.0
    %395 = vmatpush2.msra.mxu0 %v315
    %396 = vmatprep.subr.mxu0 0.0
    %397 = vmatpush2.msra.mxu0 %v314
    %398 = vmatprep.subr.mxu0 0.0
    %399 = vmatpush2.msra.mxu0 %v313
    %400 = vmatprep.mubr.f32.mxu0 %v296
    %401 = vmatmul.mubr.f32.gmra.mxu0 %v295
    %v402 = vpop.f32.mrf.mxu0
    %v403 = vadd.f32 %v334, %v402
    %v404 = vpop.f32.mrf.mxu0
    %405 = vdwg.mxu0
    %vm406 = vcmp.ge.f32.partialorder %v403, 0.0
    %v407 = vmul.f32 %v403, 0.2
    %v408 = vsel %vm406, %v403, %v407
    %v409 = vld [vmem:[%s7] sm:$0xf]
    %v410 = vld [vmem:[%s8] sm:$0xf]
    %412 = vset.pattern.permute.xlu0 0
    %413 = vperm.xlu0 %412, %v410
    %v414 = vpop.permute.xlu0 %413
    %v417 = vsel %vm63, %v409, 0
    %v420 = vsel %vm63, %v408, 0
    %422 = vmatprep.subr.mxu0 0.0
    %423 = vmatpush1.xpose.msra.mxu0 0.0
    %424 = vmatprep.subr.mxu0 0.0
    %425 = vmatpush1.xpose.msra.mxu0 0.0
    %426 = vmatprep.subr.mxu0 0.0
    %427 = vmatpush1.xpose.msra.mxu0 0.0
    %428 = vmatprep.subr.mxu0 0.0
    %429 = vmatpush1.xpose.msra.mxu0 0.0
    %430 = vmatprep.subr.mxu0 0.0
    %431 = vmatpush1.xpose.msra.mxu0 0.0
    %432 = vmatprep.subr.mxu0 0.0
    %433 = vmatpush1.xpose.msra.mxu0 0.0
    %434 = vmatprep.subr.mxu0 0.0
    %435 = vmatpush1.xpose.msra.mxu0 0.0
    %436 = vmatprep.subr.mxu0 0.0
    %437 = vmatpush1.xpose.msra.mxu0 0.0
    %438 = vmatprep.subr.mxu0 0.0
    %439 = vmatpush1.xpose.msra.mxu0 0.0
    %440 = vmatprep.subr.mxu0 0.0
    %441 = vmatpush1.xpose.msra.mxu0 0.0
    %442 = vmatprep.subr.mxu0 0.0
    %443 = vmatpush1.xpose.msra.mxu0 0.0
    %444 = vmatprep.subr.mxu0 0.0
    %445 = vmatpush1.xpose.msra.mxu0 0.0
    %446 = vmatprep.subr.mxu0 0.0
    %447 = vmatpush1.xpose.msra.mxu0 0.0
    %448 = vmatprep.subr.mxu0 0.0
    %449 = vmatpush1.xpose.msra.mxu0 0.0
    %450 = vmatprep.subr.mxu0 0.0
    %451 = vmatpush1.xpose.msra.mxu0 0.0
    %452 = vmatprep.subr.mxu0 0.0
    %453 = vmatpush1.xpose.msra.mxu0 %v420
    %454 = vmatprep.subr.mxu0 0.0
    %455 = vmatpush2.xpose.msra.mxu0 0.0
    %456 = vmatprep.subr.mxu0 0.0
    %457 = vmatpush2.xpose.msra.mxu0 0.0
    %458 = vmatprep.subr.mxu0 0.0
    %459 = vmatpush2.xpose.msra.mxu0 0.0
    %460 = vmatprep.subr.mxu0 0.0
    %461 = vmatpush2.xpose.msra.mxu0 0.0
    %462 = vmatprep.subr.mxu0 0.0
    %463 = vmatpush2.xpose.msra.mxu0 0.0
    %464 = vmatprep.subr.mxu0 0.0
    %465 = vmatpush2.xpose.msra.mxu0 0.0
    %466 = vmatprep.subr.mxu0 0.0
    %467 = vmatpush2.xpose.msra.mxu0 0.0
    %468 = vmatprep.subr.mxu0 0.0
    %469 = vmatpush2.xpose.msra.mxu0 0.0
    %470 = vmatprep.subr.mxu0 0.0
    %471 = vmatpush2.xpose.msra.mxu0 0.0
    %472 = vmatprep.subr.mxu0 0.0
    %473 = vmatpush2.xpose.msra.mxu0 0.0
    %474 = vmatprep.subr.mxu0 0.0
    %475 = vmatpush2.xpose.msra.mxu0 0.0
    %476 = vmatprep.subr.mxu0 0.0
    %477 = vmatpush2.xpose.msra.mxu0 0.0
    %478 = vmatprep.subr.mxu0 0.0
    %479 = vmatpush2.xpose.msra.mxu0 0.0
    %480 = vmatprep.subr.mxu0 0.0
    %481 = vmatpush2.xpose.msra.mxu0 0.0
    %482 = vmatprep.subr.mxu0 0.0
    %483 = vmatpush2.xpose.msra.mxu0 0.0
    %484 = vmatprep.subr.mxu0 0.0
    %485 = vmatpush2.xpose.msra.mxu0 0.0
    %486 = vmatprep.mubr.f32.mxu0 0.0
    %487 = vmatmul.mubr.f32.gmra.mxu0 %v417
    %v488 = vpop.f32.mrf.mxu0
    %v489 = vadd.f32 %v414, %v488
    %v490 = vpop.f32.mrf.mxu0
    %491 = vdwg.mxu0
    %vm492 = vcmask 11264
    %v493 = vsel %vm492, %v489, -inf
    %v494 = vrot.slane %v493, 4
    %v495 = vmax.f32 %v493, %v494
    %v496 = vrot.slane %v495, 2
    %v497 = vmax.f32 %v495, %v496
    %v498 = vrot.slane %v497, 1
    %v499 = vmax.f32 %v497, %v498
    %v500 = vsub.f32 %v489, %v499
    %v501 = vmul.f32 %v500, 1.442695
    %v502 = vpow.pop %v501
    %v503 = vsel %vm492, %v502, 0.0
    %v504 = vrot.slane %v503, 4
    %v505 = vadd.f32 %v503, %v504
    %v506 = vrot.slane %v505, 2
    %v507 = vadd.f32 %v505, %v506
    %v508 = vrot.slane %v507, 1
    %v509 = vadd.f32 %v507, %v508
    %v510 = vrcp.pop %v509
    %v511 = vmul.f32 %v502, %v510
    %512 = vst.msk [vmem:[%s9] sm:$0xf] %vm492, %v511
    // Predicated region
    $region42: #{policy_net_forward.1} parent=1 // pred_check
      _
    $region43: #{policy_net_forward.1} parent=1 // pred_check_branch
      %514 = sbr.rel (0) target = $region45
    $region44: #{policy_net_forward.1} parent=1 // pred_region
      _
    $region45: #{policy_net_forward.1} parent=1 // pred_fallthru
      _
    // Predicated region
    $region46: #{policy_net_forward.1} parent=1 // pred_check
      _
    $region47: #{policy_net_forward.1} parent=1 // pred_check_branch
      %516 = sbr.rel (0) target = $region49
    $region48: #{policy_net_forward.1} parent=1 // pred_region
      _
    $region49: #{policy_net_forward.1} parent=1 // pred_fallthru
      _
    %517 = vsyncpa [#allocation3], 1

</llo_original>
